<compile_context>
chip_gen: v5e
topology: v5e:2x2
jax: 0.10.0
libtpu: 0.0.40
codegen_flags: <defaults>
</compile_context>

<pallas_src>
import jax
import jax.numpy as jnp
import numpy as np
from jax.experimental import pallas as pl
from jax.experimental.pallas import tpu as pltpu


def _conv_tap_fma_kernel(w_ref, b_ref, taps_ref, o_ref):
    """Unrolled VPU broadcast-FMA convolution (tap-major / channel-major).

    w_ref:    SMEM [Cout*R]    flat tap weights, tap order (kh, kw, cin), f32
    b_ref:    SMEM [Cout]      bias scalars, f32
    taps_ref: VMEM [R, N, L]   im2col taps, L = lane-padded OH*OW (128)
    o_ref:    VMEM [Cout, N, L]
    """
    R, N, L = taps_ref.shape
    Cout = o_ref.shape[0]

    # Each tap is a contiguous [N, L] slab (lane-dense); load once, reuse
    # across all output channels.
    taps = [taps_ref[r] for r in range(R)]

    for co in range(Cout):
        base = co * R
        # Weighted taps, then a pairwise tree-sum (dep chain 12 -> 4).
        terms = [w_ref[base + r] * taps[r] for r in range(R)]
        while len(terms) > 1:
            nxt = [terms[i] + terms[i + 1] for i in range(0, len(terms) - 1, 2)]
            if len(terms) % 2:
                nxt.append(terms[-1])
            terms = nxt
        # Bias from SMEM scalar; one contiguous [N, L] store per channel.
        o_ref[co] = (terms[0] + b_ref[co]).astype(o_ref.dtype)


def conv2d_pallas(x_nchw, weight, bias, *, stride=2, padding=2):
    """x_nchw: [N, Cin, H, W], weight: [Cout, Cin, KH, KW], bias: [Cout]."""
    N, Cin, H, W = x_nchw.shape
    Cout, Cin_w, KH, KW = weight.shape
    assert Cin == Cin_w
    OH = (H + 2 * padding - KH) // stride + 1
    OW = (W + 2 * padding - KW) // stride + 1
    # Non-overlapping-window fast path: stride == kernel and the padded extent
    # is exactly covered by the output windows (holds here: 20 = 2*10).
    assert stride == KH == KW
    assert H + 2 * padding == stride * OH
    assert W + 2 * padding == stride * OW

    R = KH * KW * Cin             # 12 taps
    M = OH * OW                   # 100 spatial outputs per (n, cout)
    L = ((M + 127) // 128) * 128  # lane-pad -> 128: lane-dense loads & stores

    # ---- glue: one pad + one transpose copy (tap-major im2col) -------------
    xp = jnp.pad(x_nchw, ((0, 0), (0, 0), (padding, padding), (padding, padding)))
    t = xp.reshape(N, Cin, OH, KH, OW, KW)
    t = jnp.transpose(t, (3, 5, 1, 0, 2, 4))             # [KH, KW, Cin, N, OH, OW]
    taps = t.reshape(R, N, M)
    taps = jnp.pad(taps, ((0, 0), (0, 0), (0, L - M)))   # [R, N, L] lane-dense

    # Weights -> flat [Cout*R] scalars in tap order (kh, kw, cin); SMEM.
    w_flat = jnp.transpose(weight, (0, 2, 3, 1)).reshape(Cout * R).astype(jnp.float32)
    b = bias.astype(jnp.float32)

    cost = pl.CostEstimate(
        flops=2 * N * Cout * M * R,
        transcendentals=0,
        bytes_accessed=(R * N * L + Cout * N * L) * 4 + (Cout * R + Cout) * 4,
    )

    out = pl.pallas_call(
        _conv_tap_fma_kernel,
        out_shape=jax.ShapeDtypeStruct((Cout, N, L), x_nchw.dtype),
        in_specs=[
            pl.BlockSpec(memory_space=pltpu.MemorySpace.SMEM),   # w_flat
            pl.BlockSpec(memory_space=pltpu.MemorySpace.SMEM),   # bias
            pl.BlockSpec(memory_space=pltpu.MemorySpace.VMEM),   # taps
        ],
        out_specs=pl.BlockSpec(memory_space=pltpu.MemorySpace.VMEM),
        cost_estimate=cost,
    )(w_flat, b, taps)

    # [Cout, N, L] -> NCHW (drop lane padding; tiny transpose fuses w/ slice).
    # NOTE: padded lanes (>= M) contain bias, not zeros -- sliced off here.
    return jnp.transpose(out[:, :, :M], (1, 0, 2)).reshape(N, Cout, OH, OW)


if __name__ == "__main__":
    key = jax.random.PRNGKey(0)
    k_x, k_w, k_b = jax.random.split(key, 3)

    # Conv2d(3, 3, 2) requires 3 input channels; batch=4, 16x16 spatial.
    N, Cin, H, W = 4, 3, 16, 16
    Cout, KH, KW = 3, 2, 2

    x = jax.random.normal(k_x, (N, Cin, H, W), dtype=jnp.float32)
    fan_in = Cin * KH * KW
    bound = 1.0 / np.sqrt(fan_in)
    weight = jax.random.uniform(k_w, (Cout, Cin, KH, KW),
                                minval=-bound, maxval=bound, dtype=jnp.float32)
    bias = jax.random.uniform(k_b, (Cout,),
                              minval=-bound, maxval=bound, dtype=jnp.float32)

    conv2d = jax.jit(conv2d_pallas, static_argnames=("stride", "padding"))
    y = conv2d(x, weight, bias, stride=2, padding=2)
    y = jax.block_until_ready(y)

    # Reference check with XLA conv (NCHW / OIHW).
    y_ref = jax.lax.conv_general_dilated(
        x, weight, window_strides=(2, 2), padding=((2, 2), (2, 2)),
        dimension_numbers=("NCHW", "OIHW", "NCHW"),
    ) + bias.reshape(1, Cout, 1, 1)
    assert y.shape == (N, Cout, 10, 10), y.shape
    assert np.allclose(np.asarray(y), np.asarray(y_ref), atol=1e-4), "mismatch"

    print("KERNEL_OK")
</pallas_src>

<mosaic_0001>
module attributes {stable_mosaic.version = 11 : i64} {
  func.func @_conv_tap_fma_kernel(%arg0: memref<36xf32, #tpu.memory_space<smem>>, %arg1: memref<3xf32, #tpu.memory_space<smem>>, %arg2: memref<12x4x128xf32, #tpu.memory_space<vmem>>, %arg3: memref<3x4x128xf32, #tpu.memory_space<vmem>>) attributes {dimension_semantics = [], scalar_prefetch = 0 : i64, scratch_operands = 0 : i64, tpu.core_type = #tpu.core_type<tc>} {
    %c0 = arith.constant 0 : index
    %c0_0 = arith.constant 0 : index
    %c0_1 = arith.constant 0 : index
    %0 = vector.load %arg2[%c0, %c0_0, %c0_1] : memref<12x4x128xf32, #tpu.memory_space<vmem>>, vector<1x4x128xf32>
    %1 = vector.shape_cast %0 : vector<1x4x128xf32> to vector<4x128xf32>
    %c1 = arith.constant 1 : index
    %c0_2 = arith.constant 0 : index
    %c0_3 = arith.constant 0 : index
    %2 = vector.load %arg2[%c1, %c0_2, %c0_3] : memref<12x4x128xf32, #tpu.memory_space<vmem>>, vector<1x4x128xf32>
    %3 = vector.shape_cast %2 : vector<1x4x128xf32> to vector<4x128xf32>
    %c2 = arith.constant 2 : index
    %c0_4 = arith.constant 0 : index
    %c0_5 = arith.constant 0 : index
    %4 = vector.load %arg2[%c2, %c0_4, %c0_5] : memref<12x4x128xf32, #tpu.memory_space<vmem>>, vector<1x4x128xf32>
    %5 = vector.shape_cast %4 : vector<1x4x128xf32> to vector<4x128xf32>
    %c3 = arith.constant 3 : index
    %c0_6 = arith.constant 0 : index
    %c0_7 = arith.constant 0 : index
    %6 = vector.load %arg2[%c3, %c0_6, %c0_7] : memref<12x4x128xf32, #tpu.memory_space<vmem>>, vector<1x4x128xf32>
    %7 = vector.shape_cast %6 : vector<1x4x128xf32> to vector<4x128xf32>
    %c4 = arith.constant 4 : index
    %c0_8 = arith.constant 0 : index
    %c0_9 = arith.constant 0 : index
    %8 = vector.load %arg2[%c4, %c0_8, %c0_9] : memref<12x4x128xf32, #tpu.memory_space<vmem>>, vector<1x4x128xf32>
    %9 = vector.shape_cast %8 : vector<1x4x128xf32> to vector<4x128xf32>
    %c5 = arith.constant 5 : index
    %c0_10 = arith.constant 0 : index
    %c0_11 = arith.constant 0 : index
    %10 = vector.load %arg2[%c5, %c0_10, %c0_11] : memref<12x4x128xf32, #tpu.memory_space<vmem>>, vector<1x4x128xf32>
    %11 = vector.shape_cast %10 : vector<1x4x128xf32> to vector<4x128xf32>
    %c6 = arith.constant 6 : index
    %c0_12 = arith.constant 0 : index
    %c0_13 = arith.constant 0 : index
    %12 = vector.load %arg2[%c6, %c0_12, %c0_13] : memref<12x4x128xf32, #tpu.memory_space<vmem>>, vector<1x4x128xf32>
    %13 = vector.shape_cast %12 : vector<1x4x128xf32> to vector<4x128xf32>
    %c7 = arith.constant 7 : index
    %c0_14 = arith.constant 0 : index
    %c0_15 = arith.constant 0 : index
    %14 = vector.load %arg2[%c7, %c0_14, %c0_15] : memref<12x4x128xf32, #tpu.memory_space<vmem>>, vector<1x4x128xf32>
    %15 = vector.shape_cast %14 : vector<1x4x128xf32> to vector<4x128xf32>
    %c8 = arith.constant 8 : index
    %c0_16 = arith.constant 0 : index
    %c0_17 = arith.constant 0 : index
    %16 = vector.load %arg2[%c8, %c0_16, %c0_17] : memref<12x4x128xf32, #tpu.memory_space<vmem>>, vector<1x4x128xf32>
    %17 = vector.shape_cast %16 : vector<1x4x128xf32> to vector<4x128xf32>
    %c9 = arith.constant 9 : index
    %c0_18 = arith.constant 0 : index
    %c0_19 = arith.constant 0 : index
    %18 = vector.load %arg2[%c9, %c0_18, %c0_19] : memref<12x4x128xf32, #tpu.memory_space<vmem>>, vector<1x4x128xf32>
    %19 = vector.shape_cast %18 : vector<1x4x128xf32> to vector<4x128xf32>
    %c10 = arith.constant 10 : index
    %c0_20 = arith.constant 0 : index
    %c0_21 = arith.constant 0 : index
    %20 = vector.load %arg2[%c10, %c0_20, %c0_21] : memref<12x4x128xf32, #tpu.memory_space<vmem>>, vector<1x4x128xf32>
    %21 = vector.shape_cast %20 : vector<1x4x128xf32> to vector<4x128xf32>
    %c11 = arith.constant 11 : index
    %c0_22 = arith.constant 0 : index
    %c0_23 = arith.constant 0 : index
    %22 = vector.load %arg2[%c11, %c0_22, %c0_23] : memref<12x4x128xf32, #tpu.memory_space<vmem>>, vector<1x4x128xf32>
    %23 = vector.shape_cast %22 : vector<1x4x128xf32> to vector<4x128xf32>
    %c0_24 = arith.constant 0 : index
    %24 = memref.load %arg0[%c0_24] : memref<36xf32, #tpu.memory_space<smem>>
    %25 = vector.broadcast %24 : f32 to vector<4x128xf32>
    %26 = arith.mulf %25, %1 : vector<4x128xf32>
    %c1_25 = arith.constant 1 : index
    %27 = memref.load %arg0[%c1_25] : memref<36xf32, #tpu.memory_space<smem>>
    %28 = vector.broadcast %27 : f32 to vector<4x128xf32>
    %29 = arith.mulf %28, %3 : vector<4x128xf32>
    %c2_26 = arith.constant 2 : index
    %30 = memref.load %arg0[%c2_26] : memref<36xf32, #tpu.memory_space<smem>>
    %31 = vector.broadcast %30 : f32 to vector<4x128xf32>
    %32 = arith.mulf %31, %5 : vector<4x128xf32>
    %c3_27 = arith.constant 3 : index
    %33 = memref.load %arg0[%c3_27] : memref<36xf32, #tpu.memory_space<smem>>
    %34 = vector.broadcast %33 : f32 to vector<4x128xf32>
    %35 = arith.mulf %34, %7 : vector<4x128xf32>
    %c4_28 = arith.constant 4 : index
    %36 = memref.load %arg0[%c4_28] : memref<36xf32, #tpu.memory_space<smem>>
    %37 = vector.broadcast %36 : f32 to vector<4x128xf32>
    %38 = arith.mulf %37, %9 : vector<4x128xf32>
    %c5_29 = arith.constant 5 : index
    %39 = memref.load %arg0[%c5_29] : memref<36xf32, #tpu.memory_space<smem>>
    %40 = vector.broadcast %39 : f32 to vector<4x128xf32>
    %41 = arith.mulf %40, %11 : vector<4x128xf32>
    %c6_30 = arith.constant 6 : index
    %42 = memref.load %arg0[%c6_30] : memref<36xf32, #tpu.memory_space<smem>>
    %43 = vector.broadcast %42 : f32 to vector<4x128xf32>
    %44 = arith.mulf %43, %13 : vector<4x128xf32>
    %c7_31 = arith.constant 7 : index
    %45 = memref.load %arg0[%c7_31] : memref<36xf32, #tpu.memory_space<smem>>
    %46 = vector.broadcast %45 : f32 to vector<4x128xf32>
    %47 = arith.mulf %46, %15 : vector<4x128xf32>
    %c8_32 = arith.constant 8 : index
    %48 = memref.load %arg0[%c8_32] : memref<36xf32, #tpu.memory_space<smem>>
    %49 = vector.broadcast %48 : f32 to vector<4x128xf32>
    %50 = arith.mulf %49, %17 : vector<4x128xf32>
    %c9_33 = arith.constant 9 : index
    %51 = memref.load %arg0[%c9_33] : memref<36xf32, #tpu.memory_space<smem>>
    %52 = vector.broadcast %51 : f32 to vector<4x128xf32>
    %53 = arith.mulf %52, %19 : vector<4x128xf32>
    %c10_34 = arith.constant 10 : index
    %54 = memref.load %arg0[%c10_34] : memref<36xf32, #tpu.memory_space<smem>>
    %55 = vector.broadcast %54 : f32 to vector<4x128xf32>
    %56 = arith.mulf %55, %21 : vector<4x128xf32>
    %c11_35 = arith.constant 11 : index
    %57 = memref.load %arg0[%c11_35] : memref<36xf32, #tpu.memory_space<smem>>
    %58 = vector.broadcast %57 : f32 to vector<4x128xf32>
    %59 = arith.mulf %58, %23 : vector<4x128xf32>
    %60 = arith.addf %26, %29 : vector<4x128xf32>
    %61 = arith.addf %32, %35 : vector<4x128xf32>
    %62 = arith.addf %38, %41 : vector<4x128xf32>
    %63 = arith.addf %44, %47 : vector<4x128xf32>
    %64 = arith.addf %50, %53 : vector<4x128xf32>
    %65 = arith.addf %56, %59 : vector<4x128xf32>
    %66 = arith.addf %60, %61 : vector<4x128xf32>
    %67 = arith.addf %62, %63 : vector<4x128xf32>
    %68 = arith.addf %64, %65 : vector<4x128xf32>
    %69 = arith.addf %66, %67 : vector<4x128xf32>
    %70 = arith.addf %69, %68 : vector<4x128xf32>
    %c0_36 = arith.constant 0 : index
    %71 = memref.load %arg1[%c0_36] : memref<3xf32, #tpu.memory_space<smem>>
    %72 = vector.broadcast %71 : f32 to vector<4x128xf32>
    %73 = arith.addf %70, %72 : vector<4x128xf32>
    %c0_37 = arith.constant 0 : index
    %c0_38 = arith.constant 0 : index
    %c0_39 = arith.constant 0 : index
    %74 = vector.load %arg3[%c0_37, %c0_38, %c0_39] : memref<3x4x128xf32, #tpu.memory_space<vmem>>, vector<1x4x128xf32>
    %75 = vector.shape_cast %74 : vector<1x4x128xf32> to vector<4x128xf32>
    %76 = vector.shape_cast %73 : vector<4x128xf32> to vector<1x4x128xf32>
    tpu.vector_store %arg3[%c0_37, %c0_38, %c0_39], %76 {strides = array<i32>} : memref<3x4x128xf32, #tpu.memory_space<vmem>>, vector<1x4x128xf32>,
    %c12 = arith.constant 12 : index
    %77 = memref.load %arg0[%c12] : memref<36xf32, #tpu.memory_space<smem>>
    %78 = vector.broadcast %77 : f32 to vector<4x128xf32>
    %79 = arith.mulf %78, %1 : vector<4x128xf32>
    %c13 = arith.constant 13 : index
    %80 = memref.load %arg0[%c13] : memref<36xf32, #tpu.memory_space<smem>>
    %81 = vector.broadcast %80 : f32 to vector<4x128xf32>
    %82 = arith.mulf %81, %3 : vector<4x128xf32>
    %c14 = arith.constant 14 : index
    %83 = memref.load %arg0[%c14] : memref<36xf32, #tpu.memory_space<smem>>
    %84 = vector.broadcast %83 : f32 to vector<4x128xf32>
    %85 = arith.mulf %84, %5 : vector<4x128xf32>
    %c15 = arith.constant 15 : index
    %86 = memref.load %arg0[%c15] : memref<36xf32, #tpu.memory_space<smem>>
    %87 = vector.broadcast %86 : f32 to vector<4x128xf32>
    %88 = arith.mulf %87, %7 : vector<4x128xf32>
    %c16 = arith.constant 16 : index
    %89 = memref.load %arg0[%c16] : memref<36xf32, #tpu.memory_space<smem>>
    %90 = vector.broadcast %89 : f32 to vector<4x128xf32>
    %91 = arith.mulf %90, %9 : vector<4x128xf32>
    %c17 = arith.constant 17 : index
    %92 = memref.load %arg0[%c17] : memref<36xf32, #tpu.memory_space<smem>>
    %93 = vector.broadcast %92 : f32 to vector<4x128xf32>
    %94 = arith.mulf %93, %11 : vector<4x128xf32>
    %c18 = arith.constant 18 : index
    %95 = memref.load %arg0[%c18] : memref<36xf32, #tpu.memory_space<smem>>
    %96 = vector.broadcast %95 : f32 to vector<4x128xf32>
    %97 = arith.mulf %96, %13 : vector<4x128xf32>
    %c19 = arith.constant 19 : index
    %98 = memref.load %arg0[%c19] : memref<36xf32, #tpu.memory_space<smem>>
    %99 = vector.broadcast %98 : f32 to vector<4x128xf32>
    %100 = arith.mulf %99, %15 : vector<4x128xf32>
    %c20 = arith.constant 20 : index
    %101 = memref.load %arg0[%c20] : memref<36xf32, #tpu.memory_space<smem>>
    %102 = vector.broadcast %101 : f32 to vector<4x128xf32>
    %103 = arith.mulf %102, %17 : vector<4x128xf32>
    %c21 = arith.constant 21 : index
    %104 = memref.load %arg0[%c21] : memref<36xf32, #tpu.memory_space<smem>>
    %105 = vector.broadcast %104 : f32 to vector<4x128xf32>
    %106 = arith.mulf %105, %19 : vector<4x128xf32>
    %c22 = arith.constant 22 : index
    %107 = memref.load %arg0[%c22] : memref<36xf32, #tpu.memory_space<smem>>
    %108 = vector.broadcast %107 : f32 to vector<4x128xf32>
    %109 = arith.mulf %108, %21 : vector<4x128xf32>
    %c23 = arith.constant 23 : index
    %110 = memref.load %arg0[%c23] : memref<36xf32, #tpu.memory_space<smem>>
    %111 = vector.broadcast %110 : f32 to vector<4x128xf32>
    %112 = arith.mulf %111, %23 : vector<4x128xf32>
    %113 = arith.addf %79, %82 : vector<4x128xf32>
    %114 = arith.addf %85, %88 : vector<4x128xf32>
    %115 = arith.addf %91, %94 : vector<4x128xf32>
    %116 = arith.addf %97, %100 : vector<4x128xf32>
    %117 = arith.addf %103, %106 : vector<4x128xf32>
    %118 = arith.addf %109, %112 : vector<4x128xf32>
    %119 = arith.addf %113, %114 : vector<4x128xf32>
    %120 = arith.addf %115, %116 : vector<4x128xf32>
    %121 = arith.addf %117, %118 : vector<4x128xf32>
    %122 = arith.addf %119, %120 : vector<4x128xf32>
    %123 = arith.addf %122, %121 : vector<4x128xf32>
    %c1_40 = arith.constant 1 : index
    %124 = memref.load %arg1[%c1_40] : memref<3xf32, #tpu.memory_space<smem>>
    %125 = vector.broadcast %124 : f32 to vector<4x128xf32>
    %126 = arith.addf %123, %125 : vector<4x128xf32>
    %c1_41 = arith.constant 1 : index
    %c0_42 = arith.constant 0 : index
    %c0_43 = arith.constant 0 : index
    %127 = vector.load %arg3[%c1_41, %c0_42, %c0_43] : memref<3x4x128xf32, #tpu.memory_space<vmem>>, vector<1x4x128xf32>
    %128 = vector.shape_cast %127 : vector<1x4x128xf32> to vector<4x128xf32>
    %129 = vector.shape_cast %126 : vector<4x128xf32> to vector<1x4x128xf32>
    tpu.vector_store %arg3[%c1_41, %c0_42, %c0_43], %129 {strides = array<i32>} : memref<3x4x128xf32, #tpu.memory_space<vmem>>, vector<1x4x128xf32>,
    %c24 = arith.constant 24 : index
    %130 = memref.load %arg0[%c24] : memref<36xf32, #tpu.memory_space<smem>>
    %131 = vector.broadcast %130 : f32 to vector<4x128xf32>
    %132 = arith.mulf %131, %1 : vector<4x128xf32>
    %c25 = arith.constant 25 : index
    %133 = memref.load %arg0[%c25] : memref<36xf32, #tpu.memory_space<smem>>
    %134 = vector.broadcast %133 : f32 to vector<4x128xf32>
    %135 = arith.mulf %134, %3 : vector<4x128xf32>
    %c26 = arith.constant 26 : index
    %136 = memref.load %arg0[%c26] : memref<36xf32, #tpu.memory_space<smem>>
    %137 = vector.broadcast %136 : f32 to vector<4x128xf32>
    %138 = arith.mulf %137, %5 : vector<4x128xf32>
    %c27 = arith.constant 27 : index
    %139 = memref.load %arg0[%c27] : memref<36xf32, #tpu.memory_space<smem>>
    %140 = vector.broadcast %139 : f32 to vector<4x128xf32>
    %141 = arith.mulf %140, %7 : vector<4x128xf32>
    %c28 = arith.constant 28 : index
    %142 = memref.load %arg0[%c28] : memref<36xf32, #tpu.memory_space<smem>>
    %143 = vector.broadcast %142 : f32 to vector<4x128xf32>
    %144 = arith.mulf %143, %9 : vector<4x128xf32>
    %c29 = arith.constant 29 : index
    %145 = memref.load %arg0[%c29] : memref<36xf32, #tpu.memory_space<smem>>
    %146 = vector.broadcast %145 : f32 to vector<4x128xf32>
    %147 = arith.mulf %146, %11 : vector<4x128xf32>
    %c30 = arith.constant 30 : index
    %148 = memref.load %arg0[%c30] : memref<36xf32, #tpu.memory_space<smem>>
    %149 = vector.broadcast %148 : f32 to vector<4x128xf32>
    %150 = arith.mulf %149, %13 : vector<4x128xf32>
    %c31 = arith.constant 31 : index
    %151 = memref.load %arg0[%c31] : memref<36xf32, #tpu.memory_space<smem>>
    %152 = vector.broadcast %151 : f32 to vector<4x128xf32>
    %153 = arith.mulf %152, %15 : vector<4x128xf32>
    %c32 = arith.constant 32 : index
    %154 = memref.load %arg0[%c32] : memref<36xf32, #tpu.memory_space<smem>>
    %155 = vector.broadcast %154 : f32 to vector<4x128xf32>
    %156 = arith.mulf %155, %17 : vector<4x128xf32>
    %c33 = arith.constant 33 : index
    %157 = memref.load %arg0[%c33] : memref<36xf32, #tpu.memory_space<smem>>
    %158 = vector.broadcast %157 : f32 to vector<4x128xf32>
    %159 = arith.mulf %158, %19 : vector<4x128xf32>
    %c34 = arith.constant 34 : index
    %160 = memref.load %arg0[%c34] : memref<36xf32, #tpu.memory_space<smem>>
    %161 = vector.broadcast %160 : f32 to vector<4x128xf32>
    %162 = arith.mulf %161, %21 : vector<4x128xf32>
    %c35 = arith.constant 35 : index
    %163 = memref.load %arg0[%c35] : memref<36xf32, #tpu.memory_space<smem>>
    %164 = vector.broadcast %163 : f32 to vector<4x128xf32>
    %165 = arith.mulf %164, %23 : vector<4x128xf32>
    %166 = arith.addf %132, %135 : vector<4x128xf32>
    %167 = arith.addf %138, %141 : vector<4x128xf32>
    %168 = arith.addf %144, %147 : vector<4x128xf32>
    %169 = arith.addf %150, %153 : vector<4x128xf32>
    %170 = arith.addf %156, %159 : vector<4x128xf32>
    %171 = arith.addf %162, %165 : vector<4x128xf32>
    %172 = arith.addf %166, %167 : vector<4x128xf32>
    %173 = arith.addf %168, %169 : vector<4x128xf32>
    %174 = arith.addf %170, %171 : vector<4x128xf32>
    %175 = arith.addf %172, %173 : vector<4x128xf32>
    %176 = arith.addf %175, %174 : vector<4x128xf32>
    %c2_44 = arith.constant 2 : index
    %177 = memref.load %arg1[%c2_44] : memref<3xf32, #tpu.memory_space<smem>>
    %178 = vector.broadcast %177 : f32 to vector<4x128xf32>
    %179 = arith.addf %176, %178 : vector<4x128xf32>
    %c2_45 = arith.constant 2 : index
    %c0_46 = arith.constant 0 : index
    %c0_47 = arith.constant 0 : index
    %180 = vector.load %arg3[%c2_45, %c0_46, %c0_47] : memref<3x4x128xf32, #tpu.memory_space<vmem>>, vector<1x4x128xf32>
    %181 = vector.shape_cast %180 : vector<1x4x128xf32> to vector<4x128xf32>
    %182 = vector.shape_cast %179 : vector<4x128xf32> to vector<1x4x128xf32>
    tpu.vector_store %arg3[%c2_45, %c0_46, %c0_47], %182 {strides = array<i32>} : memref<3x4x128xf32, #tpu.memory_space<vmem>>, vector<1x4x128xf32>,
    return
  }
}

</mosaic_0001>

<llo_original>
// kernel: conv2d_pallas.1
$region0: #{conv2d_pallas.1}
  #allocation0 [shape = 'u32[]', space=smem, size = 0x4, offset = 0x4, fixed_abs, tag = 'smem constant byte address 0x4 - core index']
  #allocation1 [shape = 'u32[72,128]{1,0:T(1,128)}', space=vmem, size = 0x9000, scoped, tag = 'internal scratch']
  %s0 = inlined_call_operand.vmem [shape: f32[36], index: 0, kind: input, shape index: {}]
  %s1 = inlined_call_operand.vmem [shape: f32[3], index: 1, kind: input, shape index: {}]
  %s2 = inlined_call_operand.vmem [shape: f32[12,4,128], index: 2, kind: input, shape index: {}]
  %s3 = inlined_call_operand.vmem [shape: f32[3,4,128], index: 3, kind: output, shape index: {}]
  %s4 = sld [smem:[#allocation0]]
  $region30: #{conv2d_pallas.1} parent=0
    _
  %s6 = ssub.s32 1, %s4
  %s7 = scalar_select 0, %s6, %s4
  $region1: #{conv2d_pallas.1} parent=0
    #allocation2 [shape = 'u8[512]{0}', space=smem, size = 0x200, scoped, tag = 'input window, operand 0, single buffered']
    #allocation3 [shape = 's32[1]{0}', space=sflag, size = 0x4, scoped, tag = 'scoped memory for conv2d_pallas.1']
    #allocation4 [shape = 'u8[512]{0}', space=smem, size = 0x200, scoped, tag = 'input window, operand 1, single buffered']
    #allocation5 [shape = 's32[1]{0}', space=sflag, size = 0x4, scoped, tag = 'scoped memory for conv2d_pallas.1']
    %8 = vsyncpa [#allocation3], 0
    %9 = vsyncpa [#allocation5], 0
    // Predicated region
    $region2: #{conv2d_pallas.1} parent=1 // pred_check
      _
    $region3: #{conv2d_pallas.1} parent=1 // pred_check_branch
      %11 = sbr.rel (0) target = $region5
    $region4: #{conv2d_pallas.1} parent=1 // pred_region
      %13 = vsyncadd [#allocation3], 0
      %s15 = sshll.u32 %s0, 4
      %s16 = int_to_ptr.vmem [resolvable:$true] %s15
      %18 = dma.vmem_to_smem %s16, 16, [#allocation2], [#allocation3]
    $region5: #{conv2d_pallas.1} parent=1 // pred_fallthru
      _
    // Predicated region
    $region6: #{conv2d_pallas.1} parent=1 // pred_check
      _
    $region7: #{conv2d_pallas.1} parent=1 // pred_check_branch
      %20 = sbr.rel (0) target = $region9
    $region8: #{conv2d_pallas.1} parent=1 // pred_region
      %22 = vsyncadd [#allocation5], 0
      %s24 = sshll.u32 %s1, 4
      %s25 = int_to_ptr.vmem [resolvable:$true] %s24
      %27 = dma.vmem_to_smem %s25, 16, [#allocation4], [#allocation5]
    $region9: #{conv2d_pallas.1} parent=1 // pred_fallthru
      _
    // Predicated region
    $region10: #{conv2d_pallas.1} parent=1 // pred_check
      _
    $region11: #{conv2d_pallas.1} parent=1 // pred_check_branch
      %29 = sbr.rel (0) target = $region13
    $region12: #{conv2d_pallas.1} parent=1 // pred_region
      _
    $region13: #{conv2d_pallas.1} parent=1 // pred_fallthru
      _
    // Predicated region
    $region14: #{conv2d_pallas.1} parent=1 // pred_check
      _
    $region15: #{conv2d_pallas.1} parent=1 // pred_check_branch
      %31 = sbr.rel (0) target = $region17
    $region16: #{conv2d_pallas.1} parent=1 // pred_region
      %33 = dma.done [#allocation3], 16
    $region17: #{conv2d_pallas.1} parent=1 // pred_fallthru
      _
    // Predicated region
    $region18: #{conv2d_pallas.1} parent=1 // pred_check
      _
    $region19: #{conv2d_pallas.1} parent=1 // pred_check_branch
      %35 = sbr.rel (0) target = $region21
    $region20: #{conv2d_pallas.1} parent=1 // pred_region
      %37 = dma.done [#allocation5], 16
    $region21: #{conv2d_pallas.1} parent=1 // pred_fallthru
      _
    %38 = sfence
    %v39 = vld [vmem:[%s2] sm:$0xf]
    %s40 = scalar_lea.vmem %s2, 4
    %v41 = vld [vmem:[%s40] sm:$0xf]
    %s42 = scalar_lea.vmem %s2, 8
    %v43 = vld [vmem:[%s42] sm:$0xf]
    %s44 = scalar_lea.vmem %s2, 12
    %v45 = vld [vmem:[%s44] sm:$0xf]
    %s46 = scalar_lea.vmem %s2, 16
    %v47 = vld [vmem:[%s46] sm:$0xf]
    %s48 = scalar_lea.vmem %s2, 20
    %v49 = vld [vmem:[%s48] sm:$0xf]
    %s50 = scalar_lea.vmem %s2, 24
    %v51 = vld [vmem:[%s50] sm:$0xf]
    %s52 = scalar_lea.vmem %s2, 28
    %v53 = vld [vmem:[%s52] sm:$0xf]
    %s54 = scalar_lea.vmem %s2, 32
    %v55 = vld [vmem:[%s54] sm:$0xf]
    %s56 = scalar_lea.vmem %s2, 36
    %v57 = vld [vmem:[%s56] sm:$0xf]
    %s58 = scalar_lea.vmem %s2, 40
    %v59 = vld [vmem:[%s58] sm:$0xf]
    %s60 = scalar_lea.vmem %s2, 44
    %v61 = vld [vmem:[%s60] sm:$0xf]
    %s62 = sld [smem:[#allocation2]]
    %v63 = vstv %s62
    %v64 = vmul.f32 %v63, %v39
    %s65 = sld [smem:[#allocation2 + $0x1]]
    %v66 = vstv %s65
    %v67 = vmul.f32 %v66, %v41
    %s68 = sld [smem:[#allocation2 + $0x2]]
    %v69 = vstv %s68
    %v70 = vmul.f32 %v69, %v43
    %s71 = sld [smem:[#allocation2 + $0x3]]
    %v72 = vstv %s71
    %v73 = vmul.f32 %v72, %v45
    %s74 = sld [smem:[#allocation2 + $0x4]]
    %v75 = vstv %s74
    %v76 = vmul.f32 %v75, %v47
    %s77 = sld [smem:[#allocation2 + $0x5]]
    %v78 = vstv %s77
    %v79 = vmul.f32 %v78, %v49
    %s80 = sld [smem:[#allocation2 + $0x6]]
    %v81 = vstv %s80
    %v82 = vmul.f32 %v81, %v51
    %s83 = sld [smem:[#allocation2 + $0x7]]
    %v84 = vstv %s83
    %v85 = vmul.f32 %v84, %v53
    %s86 = sld [smem:[#allocation2 + $0x8]]
    %v87 = vstv %s86
    %v88 = vmul.f32 %v87, %v55
    %s89 = sld [smem:[#allocation2 + $0x9]]
    %v90 = vstv %s89
    %v91 = vmul.f32 %v90, %v57
    %s92 = sld [smem:[#allocation2 + $0xa]]
    %v93 = vstv %s92
    %v94 = vmul.f32 %v93, %v59
    %s95 = sld [smem:[#allocation2 + $0xb]]
    %v96 = vstv %s95
    %v97 = vmul.f32 %v96, %v61
    %v98 = vadd.f32 %v64, %v67
    %v99 = vadd.f32 %v70, %v73
    %v100 = vadd.f32 %v76, %v79
    %v101 = vadd.f32 %v82, %v85
    %v102 = vadd.f32 %v88, %v91
    %v103 = vadd.f32 %v94, %v97
    %v104 = vadd.f32 %v98, %v99
    %v105 = vadd.f32 %v100, %v101
    %v106 = vadd.f32 %v102, %v103
    %v107 = vadd.f32 %v104, %v105
    %v108 = vadd.f32 %v107, %v106
    %s109 = sld [smem:[#allocation4]]
    %v110 = vstv %s109
    %v111 = vadd.f32 %v108, %v110
    %112 = vst [vmem:[%s3] sm:$0xf] %v111
    %s113 = sld [smem:[#allocation2 + $0xc]]
    %v114 = vstv %s113
    %v115 = vmul.f32 %v114, %v39
    %s116 = sld [smem:[#allocation2 + $0xd]]
    %v117 = vstv %s116
    %v118 = vmul.f32 %v117, %v41
    %s119 = sld [smem:[#allocation2 + $0xe]]
    %v120 = vstv %s119
    %v121 = vmul.f32 %v120, %v43
    %s122 = sld [smem:[#allocation2 + $0xf]]
    %v123 = vstv %s122
    %v124 = vmul.f32 %v123, %v45
    %s125 = sld [smem:[#allocation2 + $0x10]]
    %v126 = vstv %s125
    %v127 = vmul.f32 %v126, %v47
    %s128 = sld [smem:[#allocation2 + $0x11]]
    %v129 = vstv %s128
    %v130 = vmul.f32 %v129, %v49
    %s131 = sld [smem:[#allocation2 + $0x12]]
    %v132 = vstv %s131
    %v133 = vmul.f32 %v132, %v51
    %s134 = sld [smem:[#allocation2 + $0x13]]
    %v135 = vstv %s134
    %v136 = vmul.f32 %v135, %v53
    %s137 = sld [smem:[#allocation2 + $0x14]]
    %v138 = vstv %s137
    %v139 = vmul.f32 %v138, %v55
    %s140 = sld [smem:[#allocation2 + $0x15]]
    %v141 = vstv %s140
    %v142 = vmul.f32 %v141, %v57
    %s143 = sld [smem:[#allocation2 + $0x16]]
    %v144 = vstv %s143
    %v145 = vmul.f32 %v144, %v59
    %s146 = sld [smem:[#allocation2 + $0x17]]
    %v147 = vstv %s146
    %v148 = vmul.f32 %v147, %v61
    %v149 = vadd.f32 %v115, %v118
    %v150 = vadd.f32 %v121, %v124
    %v151 = vadd.f32 %v127, %v130
    %v152 = vadd.f32 %v133, %v136
    %v153 = vadd.f32 %v139, %v142
    %v154 = vadd.f32 %v145, %v148
    %v155 = vadd.f32 %v149, %v150
    %v156 = vadd.f32 %v151, %v152
    %v157 = vadd.f32 %v153, %v154
    %v158 = vadd.f32 %v155, %v156
    %v159 = vadd.f32 %v158, %v157
    %s160 = sld [smem:[#allocation4 + $0x1]]
    %v161 = vstv %s160
    %v162 = vadd.f32 %v159, %v161
    %s163 = scalar_lea.vmem %s3, 4
    %164 = vst [vmem:[%s163] sm:$0xf] %v162
    %s165 = sld [smem:[#allocation2 + $0x18]]
    %v166 = vstv %s165
    %v167 = vmul.f32 %v166, %v39
    %s168 = sld [smem:[#allocation2 + $0x19]]
    %v169 = vstv %s168
    %v170 = vmul.f32 %v169, %v41
    %s171 = sld [smem:[#allocation2 + $0x1a]]
    %v172 = vstv %s171
    %v173 = vmul.f32 %v172, %v43
    %s174 = sld [smem:[#allocation2 + $0x1b]]
    %v175 = vstv %s174
    %v176 = vmul.f32 %v175, %v45
    %s177 = sld [smem:[#allocation2 + $0x1c]]
    %v178 = vstv %s177
    %v179 = vmul.f32 %v178, %v47
    %s180 = sld [smem:[#allocation2 + $0x1d]]
    %v181 = vstv %s180
    %v182 = vmul.f32 %v181, %v49
    %s183 = sld [smem:[#allocation2 + $0x1e]]
    %v184 = vstv %s183
    %v185 = vmul.f32 %v184, %v51
    %s186 = sld [smem:[#allocation2 + $0x1f]]
    %v187 = vstv %s186
    %v188 = vmul.f32 %v187, %v53
    %s189 = sld [smem:[#allocation2 + $0x20]]
    %v190 = vstv %s189
    %v191 = vmul.f32 %v190, %v55
    %s192 = sld [smem:[#allocation2 + $0x21]]
    %v193 = vstv %s192
    %v194 = vmul.f32 %v193, %v57
    %s195 = sld [smem:[#allocation2 + $0x22]]
    %v196 = vstv %s195
    %v197 = vmul.f32 %v196, %v59
    %s198 = sld [smem:[#allocation2 + $0x23]]
    %v199 = vstv %s198
    %v200 = vmul.f32 %v199, %v61
    %v201 = vadd.f32 %v167, %v170
    %v202 = vadd.f32 %v173, %v176
    %v203 = vadd.f32 %v179, %v182
    %v204 = vadd.f32 %v185, %v188
    %v205 = vadd.f32 %v191, %v194
    %v206 = vadd.f32 %v197, %v200
    %v207 = vadd.f32 %v201, %v202
    %v208 = vadd.f32 %v203, %v204
    %v209 = vadd.f32 %v205, %v206
    %v210 = vadd.f32 %v207, %v208
    %v211 = vadd.f32 %v210, %v209
    %s212 = sld [smem:[#allocation4 + $0x2]]
    %v213 = vstv %s212
    %v214 = vadd.f32 %v211, %v213
    %s215 = scalar_lea.vmem %s3, 8
    %216 = vst [vmem:[%s215] sm:$0xf] %v214
    // Predicated region
    $region22: #{conv2d_pallas.1} parent=1 // pred_check
      _
    $region23: #{conv2d_pallas.1} parent=1 // pred_check_branch
      %218 = sbr.rel (0) target = $region25
    $region24: #{conv2d_pallas.1} parent=1 // pred_region
      _
    $region25: #{conv2d_pallas.1} parent=1 // pred_fallthru
      _
    // Predicated region
    $region26: #{conv2d_pallas.1} parent=1 // pred_check
      _
    $region27: #{conv2d_pallas.1} parent=1 // pred_check_branch
      %220 = sbr.rel (0) target = $region29
    $region28: #{conv2d_pallas.1} parent=1 // pred_region
      _
    $region29: #{conv2d_pallas.1} parent=1 // pred_fallthru
      _
    %221 = vsyncpa [#allocation3], 1
    %222 = vsyncpa [#allocation5], 1

</llo_original>
